<compile_context>
chip_gen: v7x
topology: tpu7x:2x2x1
jax: 0.10.0
libtpu: 0.0.40
codegen_flags: <defaults>
</compile_context>

<pallas_src>
import math
import functools

import jax
import jax.numpy as jnp
from jax.experimental import pallas as pl
from jax.experimental.pallas import tpu as pltpu


def _round_up(x, m):
    return ((x + m - 1) // m) * m


# ---------------------------------------------------------------------------
# Kernel
# ---------------------------------------------------------------------------
def _ode_linear_kernel(x_ref, up_ref, down_ref, bias_ref, temb_ref,
                       out_ref, acc_ref, *, act):
    """One (batch block i, F tile kf) step of
         out = act(x @ up + log(time) @ up) @ down + time_embed

    x_ref    (TB, D2)  f32   batch block                 index_map (i, 0)
    up_ref   (D2, TF)  bf16  up-proj F tile              index_map (0, kf)
    down_ref (TF, D2)  bf16  down-proj F tile            index_map (kf, 0)
    bias_ref (1,  TF)  f32   log(time) @ up, F tile      index_map (0, kf)
    temb_ref (1,  D2)  f32   delta_time / time           index_map (0, 0)
    out_ref  (TB, D2)  f32   written on the last F tile  index_map (i, 0)
    acc_ref  (TB, D2)  f32   accumulator scratch (persists across F tiles)
    """
    kf = pl.program_id(1)

    @pl.when(kf == 0)
    def _():
        acc_ref[...] = jnp.zeros_like(acc_ref)

    # First matmul: bf16 operands on the MXU, f32 accumulation.  x is fed
    # WITHOUT the log(time) shift; its exact contribution (log(time) @ up,
    # computed in f32 in the wrapper) is added as a per-hidden-unit bias.
    h = jnp.dot(x_ref[...].astype(jnp.bfloat16), up_ref[...],
                preferred_element_type=jnp.float32)
    h = h + bias_ref[...]                     # (1, TF) broadcast over (TB, TF)

    # Activation in f32 (EUP slot; bf16 elementwise gains nothing on v5e).
    if act == "tanh":
        h = jnp.tanh(h)
    else:  # silu
        h = h * jax.nn.sigmoid(h)

    # Second matmul: bf16 activation operand, f32 accumulation into scratch.
    acc_ref[...] += jnp.dot(h.astype(jnp.bfloat16), down_ref[...],
                            preferred_element_type=jnp.float32)

    @pl.when(kf == pl.num_programs(1) - 1)
    def _():
        out_ref[...] = (acc_ref[...] + temb_ref[...]).astype(out_ref.dtype)


# ---------------------------------------------------------------------------
# Time embedding (pure JAX glue, mirrors ODELinear.get_time_embedding)
# ---------------------------------------------------------------------------
def get_time_embedding(t, dim, base=10000.0):
    t = jnp.asarray(t, jnp.float32)
    alpha = jnp.where(t < 1.0, 1.0, 2.0 * t - 1.0)
    index = jnp.arange(0, dim, 2, dtype=jnp.float32)            # (dim//2,)
    ntk_base = base * alpha ** (dim / (dim - 2))
    ntk_inv_freq = 1.0 / ntk_base ** (index / dim)
    delta_ntk_freq = (-2.0 * index / (dim - 2)
                      / (base ** (index / dim) * alpha ** (index / (dim - 2) + 1.0)))
    return delta_ntk_freq, ntk_inv_freq


# ---------------------------------------------------------------------------
# One-time parameter preparation (hoisted out of the forward, per review)
# ---------------------------------------------------------------------------
def prepare_ode_linear_params(up_proj, down_proj, *, dim, base=10000.0,
                              act="silu", f_tile=None,
                              vmem_budget_bytes=40 * 1024 * 1024,
                              nominal_batch_block=512):
    """Pads the hidden (F) axis to the chosen F-tile size and casts both
    weight matrices to bf16 exactly once; cache the returned dict and reuse it
    across forward calls so weight prep never appears in the hot path."""
    D2, F = up_proj.shape
    assert D2 == dim // 2 and tuple(down_proj.shape) == (F, D2)
    assert act in ("tanh", "silu")

    if f_tile is None:
        # Largest F tile (multiple of 128) whose double-buffered working set
        # (bf16 up+down tiles + f32 x/out/acc blocks at a nominal batch block)
        # fits the VMEM budget.  Keeps production dims inside v7x's 64 MiB.
        tb = nominal_batch_block
        fixed = (2 * tb * D2 * 4          # x blocks (double buffered)
                 + 2 * tb * D2 * 4        # out blocks
                 + tb * D2 * 4            # accumulator
                 + 2 * D2 * 4)            # time-embed vector
        per_tf = 8 * D2 + 8               # up+down bf16 tiles (x2 buf) + bias
        avail = max(vmem_budget_bytes - fixed, per_tf * 128)
        f_tile = max(128, (avail // per_tf) // 128 * 128)
    else:
        f_tile = max(128, (int(f_tile) // 128) * 128)

    f_tile = int(min(f_tile, _round_up(F, 128)))
    if F <= f_tile:
        # Single resident F block: full-array-dim block is legal, no padding.
        f_tile = F
        Fp = F
    else:
        Fp = _round_up(F, f_tile)

    up_bf16 = jnp.zeros((D2, Fp), jnp.bfloat16).at[:, :F].set(
        up_proj.astype(jnp.bfloat16))
    down_bf16 = jnp.zeros((Fp, D2), jnp.bfloat16).at[:F, :].set(
        down_proj.astype(jnp.bfloat16))

    return dict(up_f32=up_proj.astype(jnp.float32),   # for the f32 bias GEMV
                up_bf16=up_bf16, down_bf16=down_bf16,
                dim=dim, base=float(base), act=act,
                F=F, Fp=Fp, f_tile=f_tile)


# ---------------------------------------------------------------------------
# Forward
# ---------------------------------------------------------------------------
def ode_linear_forward(params, t, x, *, batch_block=512):
    """Forward pass; `params` comes from prepare_ode_linear_params.
    batch_block is the batch tile — sweep {256, 512, 1024} on v6e/v7x."""
    B, D2 = x.shape
    dim = params["dim"]
    assert D2 == dim // 2 and params["up_bf16"].shape[0] == D2
    F, Fp, TF = params["F"], params["Fp"], params["f_tile"]
    act = params["act"]

    # --- tiny per-call time-embedding glue (O(dim) + one small GEMV) --------
    delta_time, time = get_time_embedding(t, dim, base=params["base"])
    temb = (delta_time / time)[None, :]                       # (1, D2) f32
    # Exact split: (x + log(time)) @ up == x @ up + log(time) @ up.  The f32
    # GEMV keeps the large-magnitude log term out of the bf16 x operand.
    # (For very large dim, fold this into the kernel against the resident
    #  bf16 up tiles instead, to avoid re-reading the f32 weights per call.)
    bias = jnp.log(time) @ params["up_f32"]                   # (F,) f32
    if Fp != F:
        bias = jnp.zeros((Fp,), jnp.float32).at[:F].set(bias)
    bias = bias[None, :]                                      # (1, Fp)

    # --- batch tiling --------------------------------------------------------
    x = x.astype(jnp.float32)
    if B <= batch_block:
        TB, Bp = B, B            # full-dim batch block: no padding, 1 block
        x_p = x
    else:
        TB = _round_up(min(batch_block, B), 16)   # 16-sublane bf16 packing
        Bp = _round_up(B, TB)
        x_p = x if Bp == B else jnp.zeros((Bp, D2), jnp.float32).at[:B].set(x)
    n_b = Bp // TB
    n_f = Fp // TF

    # Feature axes are NOT padded to 128: for small dim//2 the 4x extra x/out
    # DMA traffic costs more than the masked-store penalty, and for dim//2 a
    # multiple of 128 the full-dim block is already lane dense.

    # --- VMEM budget / compiler params ---------------------------------------
    vmem_need = (2 * TB * D2 * 4              # x blocks (double buffered)
                 + 2 * TB * D2 * 4            # out blocks
                 + TB * D2 * 4                # accumulator scratch
                 + 2 * (D2 * TF + TF * D2) * 2   # bf16 weight tiles (x2 buf)
                 + 2 * (TF + D2) * 4)         # bias / time-embed vectors
    vmem_limit = int(min(max(vmem_need + (4 << 20), 32 << 20), 100 << 20))

    # Batch axis "parallel" only when there are enough blocks to shard;
    # otherwise "arbitrary" avoids each TC re-DMAing the resident weights.
    batch_sem = "parallel" if n_b > 2 else "arbitrary"

    cost = pl.CostEstimate(
        flops=4 * Bp * D2 * Fp,                       # two matmuls
        transcendentals=Bp * Fp,                      # exp/tanh in activation
        bytes_accessed=(params["up_bf16"].size + params["down_bf16"].size) * 2
        + (x_p.size + Bp * D2) * 4 + (Fp + D2) * 4,
    )

    kernel = functools.partial(_ode_linear_kernel, act=act)

    out = pl.pallas_call(
        kernel,
        out_shape=jax.ShapeDtypeStruct((Bp, D2), jnp.float32),
        grid=(n_b, n_f),
        in_specs=[
            pl.BlockSpec((TB, D2), lambda i, kf: (i, 0)),
            pl.BlockSpec((D2, TF), lambda i, kf: (0, kf)),
            pl.BlockSpec((TF, D2), lambda i, kf: (kf, 0)),
            pl.BlockSpec((1, TF), lambda i, kf: (0, kf)),
            pl.BlockSpec((1, D2), lambda i, kf: (0, 0)),
        ],
        out_specs=pl.BlockSpec((TB, D2), lambda i, kf: (i, 0)),
        scratch_shapes=[pltpu.VMEM((TB, D2), jnp.float32)],
        compiler_params=pltpu.CompilerParams(
            dimension_semantics=(batch_sem, "arbitrary"),
            vmem_limit_bytes=vmem_limit),
        cost_estimate=cost,
    )(x_p, params["up_bf16"], params["down_bf16"], bias, temb)

    return out if Bp == B else out[:B]


# ---------------------------------------------------------------------------
# References
# ---------------------------------------------------------------------------
def _reference_f32(t, x, up_proj, down_proj, *, dim, base=10000.0, act="silu"):
    """Full-f32 reference, faithful to the PyTorch forward."""
    delta_time, time = get_time_embedding(t, dim, base=base)
    xs = x.astype(jnp.float32) + jnp.log(time)
    time_embed = delta_time / time
    h = xs @ up_proj.astype(jnp.float32)
    h = jnp.tanh(h) if act == "tanh" else jax.nn.silu(h)
    return h @ down_proj.astype(jnp.float32) + time_embed


def _reference_matched(t, x, up_proj, down_proj, *, dim, base=10000.0, act="silu"):
    """Mirrors the kernel's precision contract: bf16 MXU operands with f32
    accumulation, exact f32 bias split for the log(time) term."""
    delta_time, time = get_time_embedding(t, dim, base=base)
    time_embed = delta_time / time
    bias = jnp.log(time) @ up_proj.astype(jnp.float32)
    h = jnp.dot(x.astype(jnp.bfloat16), up_proj.astype(jnp.bfloat16),
                preferred_element_type=jnp.float32) + bias
    h = jnp.tanh(h) if act == "tanh" else h * jax.nn.sigmoid(h)
    y = jnp.dot(h.astype(jnp.bfloat16), down_proj.astype(jnp.bfloat16),
                preferred_element_type=jnp.float32)
    return y + time_embed


if __name__ == "__main__":
    # Module hyperparameters (small, consistent with the forward).
    dim = 64          # feature dim; x has dim//2 = 32 features
    factor = 2        # hidden width = factor*dim = 128
    act = "silu"
    base = 10000.0
    B = 8             # batch of inv-freq rows

    D2 = dim // 2
    F = factor * dim

    key = jax.random.PRNGKey(0)
    kx, kup, kdown = jax.random.split(key, 3)

    # kaiming_uniform_(a=sqrt(5)) -> U(-1/sqrt(fan_in), 1/sqrt(fan_in)), fan_in=F.
    bound = 1.0 / math.sqrt(F)
    up_proj = jax.random.uniform(kup, (D2, F), jnp.float32, -bound, bound)
    x = jax.random.normal(kx, (B, D2), jnp.float32)
    t = jnp.float32(3.0)

    # (1) Module-faithful init: reset_parameters() zeros ode_down_proj, so the
    #     forward must return time_embed broadcast over the batch (exact).
    down_zero = jnp.zeros((F, D2), jnp.float32)
    params0 = prepare_ode_linear_params(up_proj, down_zero, dim=dim, base=base,
                                        act=act)
    out0 = jax.block_until_ready(ode_linear_forward(params0, t, x))
    ref0 = _reference_f32(t, x, up_proj, down_zero, dim=dim, base=base, act=act)
    assert out0.shape == (B, D2)
    assert jnp.allclose(out0, ref0, atol=1e-6, rtol=1e-6)

    # (2) Random down_proj exercises the full matmul path; compare against a
    #     precision-matched reference plus a loose full-f32 sanity check.
    down_proj = jax.random.uniform(kdown, (F, D2), jnp.float32, -bound, bound)
    params1 = prepare_ode_linear_params(up_proj, down_proj, dim=dim, base=base,
                                        act=act)
    out1 = jax.block_until_ready(ode_linear_forward(params1, t, x))
    ref1 = _reference_matched(t, x, up_proj, down_proj, dim=dim, base=base, act=act)
    assert jnp.allclose(out1, ref1, atol=2e-4, rtol=2e-4)
    ref1_f32 = _reference_f32(t, x, up_proj, down_proj, dim=dim, base=base, act=act)
    assert jnp.allclose(out1, ref1_f32, atol=5e-2, rtol=5e-2)

    # (3) Exercise the batch-tiling path (multiple batch blocks + batch pad).
    B2 = 40
    x2 = jax.random.normal(kx, (B2, D2), jnp.float32)
    out2 = jax.block_until_ready(ode_linear_forward(params1, t, x2,
                                                    batch_block=16))
    ref2 = _reference_matched(t, x2, up_proj, down_proj, dim=dim, base=base, act=act)
    assert out2.shape == (B2, D2)
    assert jnp.allclose(out2, ref2, atol=2e-4, rtol=2e-4)

    # (4) Exercise the F-axis reduction tiling (accumulator across F tiles).
    F4 = 4 * dim
    bound4 = 1.0 / math.sqrt(F4)
    kup4, kdown4 = jax.random.split(kdown)
    up4 = jax.random.uniform(kup4, (D2, F4), jnp.float32, -bound4, bound4)
    down4 = jax.random.uniform(kdown4, (F4, D2), jnp.float32, -bound4, bound4)
    params4 = prepare_ode_linear_params(up4, down4, dim=dim, base=base, act=act,
                                        f_tile=128)
    assert params4["f_tile"] == 128 and params4["Fp"] == F4
    out4 = jax.block_until_ready(ode_linear_forward(params4, t, x))
    ref4 = _reference_matched(t, x, up4, down4, dim=dim, base=base, act=act)
    assert jnp.allclose(out4, ref4, atol=2e-4, rtol=2e-4)

    print("KERNEL_OK")
</pallas_src>

<mosaic_0001>
module attributes {stable_mosaic.version = 11 : i64} {
  func.func @_ode_linear_kernel(%arg0: i32, %arg1: i32, %arg2: memref<8x32xf32, #tpu.memory_space<vmem>>, %arg3: memref<32x128xbf16, #tpu.memory_space<vmem>>, %arg4: memref<128x32xbf16, #tpu.memory_space<vmem>>, %arg5: memref<1x128xf32, #tpu.memory_space<vmem>>, %arg6: memref<1x32xf32, #tpu.memory_space<vmem>>, %arg7: memref<8x32xf32, #tpu.memory_space<vmem>>, %arg8: memref<8x32xf32, #tpu.memory_space<vmem>>) attributes {dimension_semantics = [#tpu.dimension_semantics<arbitrary>, #tpu.dimension_semantics<arbitrary>], iteration_bounds = array<i64: 1, 1>, scalar_prefetch = 0 : i64, scratch_operands = 1 : i64, tpu.core_type = #tpu.core_type<tc>, window_params = [{transform_indices = @transform_0, window_bounds = array<i64: 8, 32>}, {transform_indices = @transform_1, window_bounds = array<i64: 32, 128>}, {transform_indices = @transform_2, window_bounds = array<i64: 128, 32>}, {transform_indices = @transform_3, window_bounds = array<i64: 1, 128>}, {pipeline_mode = #tpu.pipeline_mode<synchronous>, transform_indices = @transform_4, window_bounds = array<i64: 1, 32>}, {transform_indices = @transform_5, window_bounds = array<i64: 8, 32>}]} {
    %c0_i32 = arith.constant 0 : i32
    %0 = arith.cmpi eq, %arg1, %c0_i32 : i32
    %1 = arith.extui %0 : i1 to i32
    %c0_i32_0 = arith.constant 0 : i32
    %2 = arith.cmpi ne, %1, %c0_i32_0 : i32
    scf.if %2 {
      %cst_16 = arith.constant 0.000000e+00 : f32
      %25 = vector.broadcast %cst_16 : f32 to vector<8x32xf32>
      %c0_17 = arith.constant 0 : index
      %c0_18 = arith.constant 0 : index
      %26 = vector.load %arg8[%c0_17, %c0_18] : memref<8x32xf32, #tpu.memory_space<vmem>>, vector<8x32xf32>
      tpu.vector_store %arg8[%c0_17, %c0_18], %25 {strides = array<i32>} : memref<8x32xf32, #tpu.memory_space<vmem>>, vector<8x32xf32>,
    } else {
    }
    %c0 = arith.constant 0 : index
    %c0_1 = arith.constant 0 : index
    %3 = vector.load %arg2[%c0, %c0_1] : memref<8x32xf32, #tpu.memory_space<vmem>>, vector<8x32xf32>
    %4 = arith.truncf %3 : vector<8x32xf32> to vector<8x32xbf16>
    %c0_2 = arith.constant 0 : index
    %c0_3 = arith.constant 0 : index
    %5 = vector.load %arg3[%c0_2, %c0_3] : memref<32x128xbf16, #tpu.memory_space<vmem>>, vector<32x128xbf16>
    %cst = arith.constant dense<0.000000e+00> : vector<8x128xf32>
    %6 = tpu.matmul %4, %5, %cst {dimension_numbers = #tpu.dot_dimension_numbers<[1], [0], [0], [1], [0, 0, 1, 1], [], []>} : vector<8x32xbf16>, vector<32x128xbf16>, vector<8x128xf32> -> vector<8x128xf32>
    %c0_4 = arith.constant 0 : index
    %c0_5 = arith.constant 0 : index
    %7 = vector.load %arg5[%c0_4, %c0_5] : memref<1x128xf32, #tpu.memory_space<vmem>>, vector<1x128xf32>
    %8 = vector.broadcast %7 : vector<1x128xf32> to vector<8x128xf32>
    %9 = arith.addf %6, %8 : vector<8x128xf32>
    %10 = arith.negf %9 : vector<8x128xf32>
    %11 = math.exp %10 : vector<8x128xf32>
    %cst_6 = arith.constant 1.000000e+00 : f32
    %12 = vector.broadcast %cst_6 : f32 to vector<8x128xf32>
    %13 = arith.addf %12, %11 : vector<8x128xf32>
    %14 = arith.divf %12, %13 : vector<8x128xf32>
    %15 = arith.mulf %9, %14 : vector<8x128xf32>
    %c0_7 = arith.constant 0 : index
    %c0_8 = arith.constant 0 : index
    %16 = vector.load %arg8[%c0_7, %c0_8] : memref<8x32xf32, #tpu.memory_space<vmem>>, vector<8x32xf32>
    %17 = arith.truncf %15 : vector<8x128xf32> to vector<8x128xbf16>
    %c0_9 = arith.constant 0 : index
    %c0_10 = arith.constant 0 : index
    %18 = vector.load %arg4[%c0_9, %c0_10] : memref<128x32xbf16, #tpu.memory_space<vmem>>, vector<128x32xbf16>
    %cst_11 = arith.constant dense<0.000000e+00> : vector<8x32xf32>
    %19 = tpu.matmul %17, %18, %cst_11 {dimension_numbers = #tpu.dot_dimension_numbers<[1], [0], [0], [1], [0, 0, 1, 1], [], []>} : vector<8x128xbf16>, vector<128x32xbf16>, vector<8x32xf32> -> vector<8x32xf32>
    %20 = arith.addf %16, %19 : vector<8x32xf32>
    %c0_12 = arith.constant 0 : index
    %c0_13 = arith.constant 0 : index
    %21 = vector.load %arg8[%c0_12, %c0_13] : memref<8x32xf32, #tpu.memory_space<vmem>>, vector<8x32xf32>
    tpu.vector_store %arg8[%c0_12, %c0_13], %20 {strides = array<i32>} : memref<8x32xf32, #tpu.memory_space<vmem>>, vector<8x32xf32>,
    %c0_i32_14 = arith.constant 0 : i32
    %22 = arith.cmpi eq, %arg1, %c0_i32_14 : i32
    %23 = arith.extui %22 : i1 to i32
    %c0_i32_15 = arith.constant 0 : i32
    %24 = arith.cmpi ne, %23, %c0_i32_15 : i32
    scf.if %24 {
      %c0_16 = arith.constant 0 : index
      %c0_17 = arith.constant 0 : index
      %25 = vector.load %arg8[%c0_16, %c0_17] : memref<8x32xf32, #tpu.memory_space<vmem>>, vector<8x32xf32>
      %c0_18 = arith.constant 0 : index
      %c0_19 = arith.constant 0 : index
      %26 = vector.load %arg6[%c0_18, %c0_19] : memref<1x32xf32, #tpu.memory_space<vmem>>, vector<1x32xf32>
      %27 = vector.broadcast %26 : vector<1x32xf32> to vector<8x32xf32>
      %28 = arith.addf %25, %27 : vector<8x32xf32>
      %c0_20 = arith.constant 0 : index
      %c0_21 = arith.constant 0 : index
      %29 = vector.load %arg7[%c0_20, %c0_21] : memref<8x32xf32, #tpu.memory_space<vmem>>, vector<8x32xf32>
      tpu.vector_store %arg7[%c0_20, %c0_21], %28 {strides = array<i32>} : memref<8x32xf32, #tpu.memory_space<vmem>>, vector<8x32xf32>,
    } else {
    }
    return
  }
  func.func @transform_0(%arg0: i32, %arg1: i32) -> (i32, i32) {
    %c0_i32 = arith.constant 0 : i32
    %c0_i32_0 = arith.constant 0 : i32
    return %arg0, %c0_i32 : i32, i32
  }
  func.func @transform_1(%arg0: i32, %arg1: i32) -> (i32, i32) {
    %c0_i32 = arith.constant 0 : i32
    %c0_i32_0 = arith.constant 0 : i32
    return %c0_i32, %arg1 : i32, i32
  }
  func.func @transform_2(%arg0: i32, %arg1: i32) -> (i32, i32) {
    %c0_i32 = arith.constant 0 : i32
    %c0_i32_0 = arith.constant 0 : i32
    return %arg1, %c0_i32 : i32, i32
  }
  func.func @transform_3(%arg0: i32, %arg1: i32) -> (i32, i32) {
    %c0_i32 = arith.constant 0 : i32
    %c0_i32_0 = arith.constant 0 : i32
    return %c0_i32, %arg1 : i32, i32
  }
  func.func @transform_4(%arg0: i32, %arg1: i32) -> (i32, i32) {
    %c0_i32 = arith.constant 0 : i32
    %c0_i32_0 = arith.constant 0 : i32
    %c0_i32_1 = arith.constant 0 : i32
    return %c0_i32, %c0_i32_0 : i32, i32
  }
  func.func @transform_5(%arg0: i32, %arg1: i32) -> (i32, i32) {
    %c0_i32 = arith.constant 0 : i32
    %c0_i32_0 = arith.constant 0 : i32
    return %arg0, %c0_i32 : i32, i32
  }
}

</mosaic_0001>

<llo_original>
// kernel: tpu_custom_call.1
$region0: #{tpu_custom_call.1}
  #allocation0 [shape = 'u32[]', space=smem, size = 0x4, offset = 0x4, fixed_abs, tag = 'smem constant byte address 0x4 - core index']
  #allocation1 [shape = 'u32[144,128]{1,0:T(1,128)}', space=vmem, size = 0x12000, scoped, tag = 'internal scratch']
  #allocation2 [shape = 'f32[8,32]{1,0:T(8,128)}', space=vmem, size = 0x1000, scoped, tag = 'scratch operand']
  %s0 = inlined_call_operand.vmem [shape: f32[8,32], index: 0, kind: input, shape index: {}]
  %s1 = inlined_call_operand.vmem [shape: bf16[32,128], index: 1, kind: input, shape index: {}]
  %s2 = inlined_call_operand.vmem [shape: bf16[128,32], index: 2, kind: input, shape index: {}]
  %s3 = inlined_call_operand.vmem [shape: f32[1,128], index: 3, kind: input, shape index: {}]
  %s4 = inlined_call_operand.vmem [shape: f32[1,32], index: 4, kind: input, shape index: {}]
  %s5 = inlined_call_operand.hbm [shape: f32[8,32], index: 5, kind: output, shape index: {}]
  %s6 = sld [smem:[#allocation0]]
  $region38: #{tpu_custom_call.1} parent=0
    _
  %s8 = ssub.s32 1, %s6
  %s9 = scalar_select 0, %s8, %s6
  $region1: #{tpu_custom_call.1} parent=0
    #allocation3 [shape = 'u8[4096]{0}', space=vmem, size = 0x1000, scoped, tag = 'output window, operand 0, single buffered']
    #allocation4 [shape = 's32[1]{0}', space=sflag, size = 0x4, scoped, tag = 'scoped memory for tpu_custom_call.1']
    %10 = vsyncpa [#allocation4], 0
    // Predicated region
    $region2: #{tpu_custom_call.1} parent=1 // pred_check
      _
    $region3: #{tpu_custom_call.1} parent=1 // pred_check_branch
      %12 = sbr.rel (0) target = $region5
    $region4: #{tpu_custom_call.1} parent=1 // pred_region
      _
    $region5: #{tpu_custom_call.1} parent=1 // pred_fallthru
      _
    // Predicated region
    $region6: #{tpu_custom_call.1} parent=1 // pred_check
      _
    $region7: #{tpu_custom_call.1} parent=1 // pred_check_branch
      %14 = sbr.rel (0) target = $region9
    $region8: #{tpu_custom_call.1} parent=1 // pred_region
      _
    $region9: #{tpu_custom_call.1} parent=1 // pred_fallthru
      _
    // Predicated region
    $region10: #{tpu_custom_call.1} parent=1 // pred_check
      _
    $region11: #{tpu_custom_call.1} parent=1 // pred_check_branch
      %16 = sbr.rel (0) target = $region13
    $region12: #{tpu_custom_call.1} parent=1 // pred_region
      _
    $region13: #{tpu_custom_call.1} parent=1 // pred_fallthru
      _
    // Predicated region
    $region14: #{tpu_custom_call.1} parent=1 // pred_check
      _
    $region15: #{tpu_custom_call.1} parent=1 // pred_check_branch
      %18 = sbr.rel (0) target = $region17
    $region16: #{tpu_custom_call.1} parent=1 // pred_region
      _
    $region17: #{tpu_custom_call.1} parent=1 // pred_fallthru
      _
    // Predicated region
    $region18: #{tpu_custom_call.1} parent=1 // pred_check
      _
    $region19: #{tpu_custom_call.1} parent=1 // pred_check_branch
      %20 = sbr.rel (0) target = $region21
    $region20: #{tpu_custom_call.1} parent=1 // pred_region
      _
    $region21: #{tpu_custom_call.1} parent=1 // pred_fallthru
      _
    %p22 = scmp.eq.s32.totalorder 0, 0
    // Predicated region
    $region22: #{tpu_custom_call.1} parent=1 // pred_check
      %p23 = pneg %p22
    $region23: #{tpu_custom_call.1} parent=1 // pred_check_branch
      %25 = sbr.rel (%p23) target = $region25
    $region24: #{tpu_custom_call.1} parent=1 // pred_region
      %vm26 = vcmask 261120
      %27 = vst.msk [vmem:[#allocation2] sm:$0xff] %vm26, 0.0
    $region25: #{tpu_custom_call.1} parent=1 // pred_fallthru
      _
    %v28 = vld [vmem:[%s0] sm:$0xff]
    %v29 = vpack.c.bf16 %v28, %v28
    %v30 = vld [vmem:[%s1] sm:$0xf]
    %v31 = vld [vmem:[%s1 + $0x4] sm:$0xf]
    %v32 = vld [vmem:[%s1 + $0x8] sm:$0xf]
    %v33 = vld [vmem:[%s1 + $0xc] sm:$0xf]
    %v34 = vld [vmem:[%s3] sm:$0x1]
    %v36 = vlaneseq
    %v37 = vshrl.u32 %v36, 7
    %v38 = vsub.s32 0, %v37
    %v39 = vrot.slane %v34, %v38
    %v45 = vunpack.c.l.b16 %v30
    %v46 = vunpack.c.l.b16 %v31
    %v47 = vunpack.c.l.b16 %v32
    %v48 = vunpack.c.l.b16 %v33
    %v49 = vpack.c.b16 %v46, %v45
    %v50 = vpack.c.b16 %v48, %v47
    %vm53 = vcmask 261120
    %v55 = vsel %vm53, %v29, 0
    %57 = vmatprep.subr.bf16.mxu0 0
    %58 = vmatpush1.bf16.msra.mxu0 %v49
    %59 = vmatprep.subr.bf16.mxu0 0
    %60 = vmatpush1.bf16.msra.mxu0 %v50
    %61 = vmatprep.subr.bf16.mxu0 0
    %62 = vmatpush1.bf16.msra.mxu0 0
    %63 = vmatprep.subr.bf16.mxu0 0
    %64 = vmatpush1.bf16.msra.mxu0 0
    %65 = vmatprep.subr.bf16.mxu0 0
    %66 = vmatpush1.bf16.msra.mxu0 0
    %67 = vmatprep.subr.bf16.mxu0 0
    %68 = vmatpush1.bf16.msra.mxu0 0
    %69 = vmatprep.subr.bf16.mxu0 0
    %70 = vmatpush1.bf16.msra.mxu0 0
    %71 = vmatprep.subr.bf16.mxu0 0
    %72 = vmatpush1.bf16.msra.mxu0 0
    %73 = vmatprep.subr.bf16.mxu0 0
    %74 = vmatpush1.bf16.msra.mxu0 0
    %75 = vmatprep.subr.bf16.mxu0 0
    %76 = vmatpush1.bf16.msra.mxu0 0
    %77 = vmatprep.subr.bf16.mxu0 0
    %78 = vmatpush1.bf16.msra.mxu0 0
    %79 = vmatprep.subr.bf16.mxu0 0
    %80 = vmatpush1.bf16.msra.mxu0 0
    %81 = vmatprep.subr.bf16.mxu0 0
    %82 = vmatpush1.bf16.msra.mxu0 0
    %83 = vmatprep.subr.bf16.mxu0 0
    %84 = vmatpush1.bf16.msra.mxu0 0
    %85 = vmatprep.subr.bf16.mxu0 0
    %86 = vmatpush1.bf16.msra.mxu0 0
    %87 = vmatprep.subr.bf16.mxu0 0
    %88 = vmatpush1.bf16.msra.mxu0 0
    %89 = vmatprep.mubr.bf16.mxu0 0
    %90 = vmatmul.mubr.bf16.gmra.mrb[0].mxu0 %v55
    %v91 = vpop.f32.mrb[0].mxu0
    %v92 = vadd.f32 %v39, %v91
    %v93 = vpop.f32.mrb[0].mxu0
    %v94 = vpop.f32.mrb[0].mxu0
    %v95 = vpop.f32.mrb[0].mxu0
    %96 = vdwg.mxu0
    %v97 = vxor.u32 %v92, 2147483648
    %v98 = vmul.f32 %v97, 1.442695
    %v99 = vpow.pop %v98
    %v100 = vadd.f32 %v99, 1.0
    %v101 = vrcp.pop %v100
    %v102 = vmul.f32 1.0, %v101
    %v103 = vmul.f32 %v92, %v102
    %v104 = vld [vmem:[#allocation2] sm:$0xff]
    %v105 = vpack.c.bf16 %v103, %v103
    %v106 = vld [vmem:[%s2] sm:$0xf]
    %v107 = vld [vmem:[%s2 + $0x4] sm:$0xf]
    %v108 = vld [vmem:[%s2 + $0x8] sm:$0xf]
    %v109 = vld [vmem:[%s2 + $0xc] sm:$0xf]
    %v110 = vld [vmem:[%s2 + $0x10] sm:$0xf]
    %v111 = vld [vmem:[%s2 + $0x14] sm:$0xf]
    %v112 = vld [vmem:[%s2 + $0x18] sm:$0xf]
    %v113 = vld [vmem:[%s2 + $0x1c] sm:$0xf]
    %v114 = vld [vmem:[%s2 + $0x20] sm:$0xf]
    %v115 = vld [vmem:[%s2 + $0x24] sm:$0xf]
    %v116 = vld [vmem:[%s2 + $0x28] sm:$0xf]
    %v117 = vld [vmem:[%s2 + $0x2c] sm:$0xf]
    %v118 = vld [vmem:[%s2 + $0x30] sm:$0xf]
    %v119 = vld [vmem:[%s2 + $0x34] sm:$0xf]
    %v120 = vld [vmem:[%s2 + $0x38] sm:$0xf]
    %v121 = vld [vmem:[%s2 + $0x3c] sm:$0xf]
    %v138 = vunpack.c.l.b16 %v106
    %v139 = vunpack.c.l.b16 %v107
    %v140 = vunpack.c.l.b16 %v108
    %v141 = vunpack.c.l.b16 %v109
    %v142 = vunpack.c.l.b16 %v110
    %v143 = vunpack.c.l.b16 %v111
    %v144 = vunpack.c.l.b16 %v112
    %v145 = vunpack.c.l.b16 %v113
    %v146 = vunpack.c.l.b16 %v114
    %v147 = vunpack.c.l.b16 %v115
    %v148 = vunpack.c.l.b16 %v116
    %v149 = vunpack.c.l.b16 %v117
    %v150 = vunpack.c.l.b16 %v118
    %v151 = vunpack.c.l.b16 %v119
    %v152 = vunpack.c.l.b16 %v120
    %v153 = vunpack.c.l.b16 %v121
    %v154 = vpack.c.b16 %v139, %v138
    %v155 = vpack.c.b16 %v141, %v140
    %v156 = vpack.c.b16 %v143, %v142
    %v157 = vpack.c.b16 %v145, %v144
    %v158 = vpack.c.b16 %v147, %v146
    %v159 = vpack.c.b16 %v149, %v148
    %v160 = vpack.c.b16 %v151, %v150
    %v161 = vpack.c.b16 %v153, %v152
    %170 = vmatprep.subr.bf16.mxu0 0
    %171 = vmatpush1.bf16.msra.mxu0 %v154
    %172 = vmatprep.subr.bf16.mxu0 0
    %173 = vmatpush1.bf16.msra.mxu0 %v155
    %174 = vmatprep.subr.bf16.mxu0 0
    %175 = vmatpush1.bf16.msra.mxu0 %v156
    %176 = vmatprep.subr.bf16.mxu0 0
    %177 = vmatpush1.bf16.msra.mxu0 %v157
    %178 = vmatprep.subr.bf16.mxu0 0
    %179 = vmatpush1.bf16.msra.mxu0 %v158
    %180 = vmatprep.subr.bf16.mxu0 0
    %181 = vmatpush1.bf16.msra.mxu0 %v159
    %182 = vmatprep.subr.bf16.mxu0 0
    %183 = vmatpush1.bf16.msra.mxu0 %v160
    %184 = vmatprep.subr.bf16.mxu0 0
    %185 = vmatpush1.bf16.msra.mxu0 %v161
    %186 = vmatprep.subr.bf16.mxu0 0
    %187 = vmatpush1.bf16.msra.mxu0 0
    %188 = vmatprep.subr.bf16.mxu0 0
    %189 = vmatpush1.bf16.msra.mxu0 0
    %190 = vmatprep.subr.bf16.mxu0 0
    %191 = vmatpush1.bf16.msra.mxu0 0
    %192 = vmatprep.subr.bf16.mxu0 0
    %193 = vmatpush1.bf16.msra.mxu0 0
    %194 = vmatprep.subr.bf16.mxu0 0
    %195 = vmatpush1.bf16.msra.mxu0 0
    %196 = vmatprep.subr.bf16.mxu0 0
    %197 = vmatpush1.bf16.msra.mxu0 0
    %198 = vmatprep.subr.bf16.mxu0 0
    %199 = vmatpush1.bf16.msra.mxu0 0
    %200 = vmatprep.subr.bf16.mxu0 0
    %201 = vmatpush1.bf16.msra.mxu0 0
    %202 = vmatprep.mubr.bf16.mxu0 0
    %203 = vmatmul.mubr.bf16.gmra.mrb[0].mxu0 %v105
    %v204 = vpop.f32.mrb[0].mxu0
    %v205 = vadd.f32 0.0, %v204
    %v206 = vpop.f32.mrb[0].mxu0
    %v207 = vpop.f32.mrb[0].mxu0
    %v208 = vpop.f32.mrb[0].mxu0
    %209 = vdwg.mxu0
    %v210 = vadd.f32 %v104, %v205
    %211 = vst.msk [vmem:[#allocation2] sm:$0xff] %vm53, %v210
    // Predicated region
    $region26: #{tpu_custom_call.1} parent=1 // pred_check
      %p212 = pneg %p22
    $region27: #{tpu_custom_call.1} parent=1 // pred_check_branch
      %214 = sbr.rel (%p212) target = $region29
    $region28: #{tpu_custom_call.1} parent=1 // pred_region
      %v215 = vld [vmem:[#allocation2] sm:$0xff]
      %v216 = vld [vmem:[%s4] sm:$0x1]
      %v218 = vlaneseq
      %v219 = vshrl.u32 %v218, 7
      %v220 = vsub.s32 0, %v219
      %v221 = vrot.slane %v216, %v220
      %v223 = vadd.f32 %v215, %v221
      %224 = vst.msk [vmem:[#allocation3] sm:$0xff] %vm53, %v223
    $region29: #{tpu_custom_call.1} parent=1 // pred_fallthru
      _
    // Predicated region
    $region30: #{tpu_custom_call.1} parent=1 // pred_check
      _
    $region31: #{tpu_custom_call.1} parent=1 // pred_check_branch
      %226 = sbr.rel (0) target = $region33
    $region32: #{tpu_custom_call.1} parent=1 // pred_region
      %s228 = ssub.s32 128, 128
      %229 = vsyncadd [#allocation4], %s228
      %s231 = sshll.u32 [#allocation3], 4
      %s232 = int_to_ptr.vmem [resolvable:$true] %s231
      %234 = dma.vmem_to_hbm [thread:$0]  %s232, 128, %s5, [#allocation4]
    $region33: #{tpu_custom_call.1} parent=1 // pred_fallthru
      _
    // Predicated region
    $region34: #{tpu_custom_call.1} parent=1 // pred_check
      _
    $region35: #{tpu_custom_call.1} parent=1 // pred_check_branch
      %236 = sbr.rel (0) target = $region37
    $region36: #{tpu_custom_call.1} parent=1 // pred_region
      %237 = dma.done [#allocation4], 128
    $region37: #{tpu_custom_call.1} parent=1 // pred_fallthru
      _
    %238 = vsyncpa [#allocation4], 1

</llo_original>
